<compile_context>
chip_gen: v6e
topology: v6e:2x2x1
jax: 0.10.0
libtpu: 0.0.40
codegen_flags: <defaults>
</compile_context>

<pallas_src>
import math
import jax
import jax.numpy as jnp
from jax.experimental import pallas as pl
from jax.experimental.pallas import tpu as pltpu


def _round_up(n, m):
    return ((n + m - 1) // m) * m


def mlp_kernel(x_ref, w1_ref, b1_ref, w2_ref, b2_ref, w3_ref, b3_ref, o_ref):
    # x_ref: (tb, D_in) f32/bf16 | w1: (D_in, FF) bf16 | w2: (FF, E) bf16
    # b1: (1, FF) f32 | b2: (1, E) f32 | w3: (1, E) f32 | b3: (1, 1) f32
    x = x_ref[...].astype(jnp.bfloat16)  # no-op if the producer already hands us bf16

    # fc1 + ReLU: bf16 MXU operands, f32 accumulate; bias/ReLU in f32 on the VPU.
    h1 = jnp.dot(x, w1_ref[...], preferred_element_type=jnp.float32) + b1_ref[...]
    h1 = jnp.maximum(h1, 0.0)

    # dropout(p=0.05) -- identity in eval mode.
    # TODO(synk): training-mode dropout would need pltpu.prng_* inside the kernel.

    # fc2 + ReLU
    h2 = jnp.dot(h1.astype(jnp.bfloat16), w2_ref[...],
                 preferred_element_type=jnp.float32) + b2_ref[...]
    h2 = jnp.maximum(h2, 0.0)

    # fc3 (output_dim == 1): VPU multiply + XLU lane reduction instead of an N=1 MXU matmul.
    out = jnp.sum(h2 * w3_ref[...], axis=-1, keepdims=True) + b3_ref[...]   # (tb, 1)
    o_ref[...] = out.astype(o_ref.dtype)


def mlp_forward(x, params, *, tb=2048):
    """x: [B, input_dim] (f32 or bf16). Returns [B] f32 (squeeze(-1) of fc3 output)."""
    w1, b1, w2, b2, w3, b3 = params
    B, D_in = x.shape
    FF = w1.shape[1]
    E = w2.shape[1]
    OUT = w3.shape[1]
    # TODO(synk): generalize fc3 reduction for output_dim > 1 (module default is 1).
    assert OUT == 1, "kernel implements the module default output_dim=1"

    # Tile pick: sublane-aligned, no bigger than the batch, and keep >= 4 grid steps
    # when the batch allows it (core parallelism on v7x, pipelining on v5e/v6e).
    tb = max(8, min(tb, _round_up(B, 8)))
    if B > 32:
        tb = min(tb, _round_up(pl.cdiv(B, 4), 8))

    grid = (pl.cdiv(B, tb),)  # ragged last block; no wrapper-side padding of x

    # Weights in bf16 for the MXU (tiny, cast once); biases / fc3 row stay f32.
    w1b = w1.astype(jnp.bfloat16)
    w2b = w2.astype(jnp.bfloat16)
    w3_row = w3.reshape(1, E).astype(jnp.float32)

    full = lambda i: (0, 0)  # whole-array blocks for parameters (resident per core)

    param_bytes = sum(int(a.size) * a.dtype.itemsize
                      for a in (w1b, b1, w2b, b2, w3_row, b3))
    cost = pl.CostEstimate(
        flops=2 * B * (D_in * FF + FF * E + E),
        transcendentals=0,
        bytes_accessed=B * D_in * x.dtype.itemsize + B * 4 + param_bytes,
    )

    out = pl.pallas_call(
        mlp_kernel,
        out_shape=jax.ShapeDtypeStruct((B, OUT), jnp.float32),
        grid_spec=pltpu.PrefetchScalarGridSpec(
            num_scalar_prefetch=0,
            grid=grid,
            in_specs=[
                pl.BlockSpec((tb, D_in), lambda i: (i, 0)),   # x tile (ragged last block)
                pl.BlockSpec((D_in, FF), full),               # W1 (bf16)
                pl.BlockSpec((1, FF), full),                  # b1
                pl.BlockSpec((FF, E), full),                  # W2 (bf16)
                pl.BlockSpec((1, E), full),                   # b2
                pl.BlockSpec((1, E), full),                   # W3 as row (f32)
                pl.BlockSpec((1, OUT), full),                 # b3
            ],
            out_specs=pl.BlockSpec((tb, OUT), lambda i: (i, 0)),
        ),
        compiler_params=pltpu.CompilerParams(
            dimension_semantics=("parallel",)),
        cost_estimate=cost,
    )(x, w1b, b1, w2b, b2, w3_row, b3)

    return out[:, 0]


def init_mlp_params(key, input_dim=128, feed_forward_dim=64, embedding_dim=64,
                    output_dim=1, dtype=jnp.float32):
    """Mimics the module's init: uniform(-stdv, stdv) with stdv = 1/sqrt(size(-1)).

    PyTorch Linear weight shape is (out, in) so stdv = 1/sqrt(in); we store weights
    transposed as (in, out) but use the same stdv. Bias size(-1)=out => stdv=1/sqrt(out).
    """
    ks = jax.random.split(key, 6)

    def u(k, shape, stdv):
        return jax.random.uniform(k, shape, dtype, minval=-stdv, maxval=stdv)

    w1 = u(ks[0], (input_dim, feed_forward_dim), 1.0 / math.sqrt(input_dim))
    b1 = u(ks[1], (1, feed_forward_dim), 1.0 / math.sqrt(feed_forward_dim))
    w2 = u(ks[2], (feed_forward_dim, embedding_dim), 1.0 / math.sqrt(feed_forward_dim))
    b2 = u(ks[3], (1, embedding_dim), 1.0 / math.sqrt(embedding_dim))
    w3 = u(ks[4], (embedding_dim, output_dim), 1.0 / math.sqrt(embedding_dim))
    b3 = u(ks[5], (1, output_dim), 1.0 / math.sqrt(output_dim))
    return (w1, b1, w2, b2, w3, b3)


def mlp_ref(x, params):
    """Pure-JAX reference mirroring the kernel math (bf16 operands, f32 accumulate)."""
    w1, b1, w2, b2, w3, b3 = params
    h1 = jnp.maximum(
        jnp.dot(x.astype(jnp.bfloat16), w1.astype(jnp.bfloat16),
                preferred_element_type=jnp.float32) + b1, 0.0)
    h2 = jnp.maximum(
        jnp.dot(h1.astype(jnp.bfloat16), w2.astype(jnp.bfloat16),
                preferred_element_type=jnp.float32) + b2, 0.0)
    return (jnp.sum(h2 * w3.reshape(1, -1), axis=-1, keepdims=True) + b3).squeeze(-1)


def mlp_ref_f32(x, params):
    """Pure-f32 reference (loose check: bf16 operands introduce ~1e-2 rel error)."""
    w1, b1, w2, b2, w3, b3 = params
    h1 = jnp.maximum(x @ w1 + b1, 0.0)
    h2 = jnp.maximum(h1 @ w2 + b2, 0.0)
    return (h2 @ w3 + b3).squeeze(-1)


if __name__ == "__main__":
    key = jax.random.PRNGKey(0)
    kx, kp = jax.random.split(key)

    # Small demo shape; batch intentionally NOT a multiple of the tile to exercise
    # the ragged (masked-writeback) last block.
    B, D_IN = 200, 128
    x = jax.random.normal(kx, (B, D_IN), dtype=jnp.float32)
    params = init_mlp_params(kp, input_dim=D_IN, feed_forward_dim=64,
                             embedding_dim=64, output_dim=1)

    out = mlp_forward(x, params)
    out = jax.block_until_ready(out)

    assert out.shape == (B,), out.shape
    ref = mlp_ref(x, params)
    assert jnp.allclose(out, ref, atol=2e-3, rtol=2e-3), "mismatch vs bf16-mirror reference"
    ref32 = mlp_ref_f32(x, params)
    assert jnp.allclose(out, ref32, atol=5e-2, rtol=5e-2), "mismatch vs f32 reference"

    # bf16-producer path: same kernel, x already bf16 (kernel astype becomes a no-op).
    out_bf16 = jax.block_until_ready(mlp_forward(x.astype(jnp.bfloat16), params))
    assert jnp.allclose(out_bf16, ref, atol=2e-3, rtol=2e-3), "mismatch on bf16-x path"

    print("KERNEL_OK")
</pallas_src>

<mosaic_0001>
module attributes {stable_mosaic.version = 11 : i64} {
  func.func @mlp_kernel(%arg0: i32, %arg1: memref<56x128xf32, #tpu.memory_space<vmem>>, %arg2: memref<128x64xbf16, #tpu.memory_space<vmem>>, %arg3: memref<1x64xf32, #tpu.memory_space<vmem>>, %arg4: memref<64x64xbf16, #tpu.memory_space<vmem>>, %arg5: memref<1x64xf32, #tpu.memory_space<vmem>>, %arg6: memref<1x64xf32, #tpu.memory_space<vmem>>, %arg7: memref<1x1xf32, #tpu.memory_space<vmem>>, %arg8: memref<56x1xf32, #tpu.memory_space<vmem>>) attributes {dimension_semantics = [#tpu.dimension_semantics<parallel>], iteration_bounds = array<i64: 4>, scalar_prefetch = 0 : i64, scratch_operands = 0 : i64, tpu.core_type = #tpu.core_type<tc>, window_params = [{transform_indices = @transform_0, window_bounds = array<i64: 56, 128>}, {pipeline_mode = #tpu.pipeline_mode<synchronous>, transform_indices = @transform_1, window_bounds = array<i64: 128, 64>}, {pipeline_mode = #tpu.pipeline_mode<synchronous>, transform_indices = @transform_2, window_bounds = array<i64: 1, 64>}, {pipeline_mode = #tpu.pipeline_mode<synchronous>, transform_indices = @transform_3, window_bounds = array<i64: 64, 64>}, {pipeline_mode = #tpu.pipeline_mode<synchronous>, transform_indices = @transform_4, window_bounds = array<i64: 1, 64>}, {pipeline_mode = #tpu.pipeline_mode<synchronous>, transform_indices = @transform_5, window_bounds = array<i64: 1, 64>}, {pipeline_mode = #tpu.pipeline_mode<synchronous>, transform_indices = @transform_6, window_bounds = array<i64: 1, 1>}, {transform_indices = @transform_7, window_bounds = array<i64: 56, 1>}]} {
    %c0 = arith.constant 0 : index
    %c0_0 = arith.constant 0 : index
    %0 = vector.load %arg1[%c0, %c0_0] : memref<56x128xf32, #tpu.memory_space<vmem>>, vector<56x128xf32>
    %1 = arith.truncf %0 : vector<56x128xf32> to vector<56x128xbf16>
    %c0_1 = arith.constant 0 : index
    %c0_2 = arith.constant 0 : index
    %2 = vector.load %arg2[%c0_1, %c0_2] : memref<128x64xbf16, #tpu.memory_space<vmem>>, vector<128x64xbf16>
    %cst = arith.constant dense<0.000000e+00> : vector<56x64xf32>
    %3 = tpu.matmul %1, %2, %cst {dimension_numbers = #tpu.dot_dimension_numbers<[1], [0], [0], [1], [0, 0, 1, 1], [], []>} : vector<56x128xbf16>, vector<128x64xbf16>, vector<56x64xf32> -> vector<56x64xf32>
    %c0_3 = arith.constant 0 : index
    %c0_4 = arith.constant 0 : index
    %4 = vector.load %arg3[%c0_3, %c0_4] : memref<1x64xf32, #tpu.memory_space<vmem>>, vector<1x64xf32>
    %5 = vector.broadcast %4 : vector<1x64xf32> to vector<56x64xf32>
    %6 = arith.addf %3, %5 : vector<56x64xf32>
    %cst_5 = arith.constant 0.000000e+00 : f32
    %7 = vector.broadcast %cst_5 : f32 to vector<56x64xf32>
    %8 = arith.maximumf %6, %7 : vector<56x64xf32>
    %9 = arith.truncf %8 : vector<56x64xf32> to vector<56x64xbf16>
    %c0_6 = arith.constant 0 : index
    %c0_7 = arith.constant 0 : index
    %10 = vector.load %arg4[%c0_6, %c0_7] : memref<64x64xbf16, #tpu.memory_space<vmem>>, vector<64x64xbf16>
    %cst_8 = arith.constant dense<0.000000e+00> : vector<56x64xf32>
    %11 = tpu.matmul %9, %10, %cst_8 {dimension_numbers = #tpu.dot_dimension_numbers<[1], [0], [0], [1], [0, 0, 1, 1], [], []>} : vector<56x64xbf16>, vector<64x64xbf16>, vector<56x64xf32> -> vector<56x64xf32>
    %c0_9 = arith.constant 0 : index
    %c0_10 = arith.constant 0 : index
    %12 = vector.load %arg5[%c0_9, %c0_10] : memref<1x64xf32, #tpu.memory_space<vmem>>, vector<1x64xf32>
    %13 = vector.broadcast %12 : vector<1x64xf32> to vector<56x64xf32>
    %14 = arith.addf %11, %13 : vector<56x64xf32>
    %cst_11 = arith.constant 0.000000e+00 : f32
    %15 = vector.broadcast %cst_11 : f32 to vector<56x64xf32>
    %16 = arith.maximumf %14, %15 : vector<56x64xf32>
    %c0_12 = arith.constant 0 : index
    %c0_13 = arith.constant 0 : index
    %17 = vector.load %arg6[%c0_12, %c0_13] : memref<1x64xf32, #tpu.memory_space<vmem>>, vector<1x64xf32>
    %18 = vector.broadcast %17 : vector<1x64xf32> to vector<56x64xf32>
    %19 = arith.mulf %16, %18 : vector<56x64xf32>
    %cst_14 = arith.constant dense<0.000000e+00> : vector<56xf32>
    %20 = vector.multi_reduction <add>, %19, %cst_14 [1] : vector<56x64xf32> to vector<56xf32>
    %21 = vector.shape_cast %20 : vector<56xf32> to vector<56x1xf32>
    %c0_15 = arith.constant 0 : index
    %c0_16 = arith.constant 0 : index
    %22 = vector.load %arg7[%c0_15, %c0_16] : memref<1x1xf32, #tpu.memory_space<vmem>>, vector<1x1xf32>
    %23 = vector.broadcast %22 : vector<1x1xf32> to vector<56x1xf32>
    %24 = arith.addf %21, %23 : vector<56x1xf32>
    %c0_17 = arith.constant 0 : index
    %c0_18 = arith.constant 0 : index
    %25 = vector.load %arg8[%c0_17, %c0_18] : memref<56x1xf32, #tpu.memory_space<vmem>>, vector<56x1xf32>
    tpu.vector_store %arg8[%c0_17, %c0_18], %24 {strides = array<i32>} : memref<56x1xf32, #tpu.memory_space<vmem>>, vector<56x1xf32>,
    return
  }
  func.func @transform_0(%arg0: i32) -> (i32, i32) {
    %c0_i32 = arith.constant 0 : i32
    %c0_i32_0 = arith.constant 0 : i32
    return %arg0, %c0_i32 : i32, i32
  }
  func.func @transform_1(%arg0: i32) -> (i32, i32) {
    %c0_i32 = arith.constant 0 : i32
    %c0_i32_0 = arith.constant 0 : i32
    %c0_i32_1 = arith.constant 0 : i32
    return %c0_i32, %c0_i32_0 : i32, i32
  }
  func.func @transform_2(%arg0: i32) -> (i32, i32) {
    %c0_i32 = arith.constant 0 : i32
    %c0_i32_0 = arith.constant 0 : i32
    %c0_i32_1 = arith.constant 0 : i32
    return %c0_i32, %c0_i32_0 : i32, i32
  }
  func.func @transform_3(%arg0: i32) -> (i32, i32) {
    %c0_i32 = arith.constant 0 : i32
    %c0_i32_0 = arith.constant 0 : i32
    %c0_i32_1 = arith.constant 0 : i32
    return %c0_i32, %c0_i32_0 : i32, i32
  }
  func.func @transform_4(%arg0: i32) -> (i32, i32) {
    %c0_i32 = arith.constant 0 : i32
    %c0_i32_0 = arith.constant 0 : i32
    %c0_i32_1 = arith.constant 0 : i32
    return %c0_i32, %c0_i32_0 : i32, i32
  }
  func.func @transform_5(%arg0: i32) -> (i32, i32) {
    %c0_i32 = arith.constant 0 : i32
    %c0_i32_0 = arith.constant 0 : i32
    %c0_i32_1 = arith.constant 0 : i32
    return %c0_i32, %c0_i32_0 : i32, i32
  }
  func.func @transform_6(%arg0: i32) -> (i32, i32) {
    %c0_i32 = arith.constant 0 : i32
    %c0_i32_0 = arith.constant 0 : i32
    %c0_i32_1 = arith.constant 0 : i32
    return %c0_i32, %c0_i32_0 : i32, i32
  }
  func.func @transform_7(%arg0: i32) -> (i32, i32) {
    %c0_i32 = arith.constant 0 : i32
    %c0_i32_0 = arith.constant 0 : i32
    return %arg0, %c0_i32 : i32, i32
  }
}

</mosaic_0001>

<llo_original>
// kernel: tpu_custom_call.1
$region0: #{tpu_custom_call.1}
  #allocation0 [shape = 'u32[]', space=smem, size = 0x4, offset = 0x4, fixed_abs, tag = 'smem constant byte address 0x4 - core index']
  #allocation1 [shape = 'u32[144,128]{1,0:T(1,128)}', space=vmem, size = 0x12000, scoped, tag = 'internal scratch']
  #allocation2 [shape = 'f32[1,1]{1,0:T(1,128)S(1)}', space=vmem, size = 0x200, scoped, tag = 'scoped memory for tpu_custom_call.1']
  %s0 = inlined_call_operand.hbm [shape: f32[200,128], index: 0, kind: input, shape index: {}]
  %s1 = inlined_call_operand.vmem [shape: bf16[128,64], index: 1, kind: input, shape index: {}]
  %s2 = inlined_call_operand.vmem [shape: f32[1,64], index: 2, kind: input, shape index: {}]
  %s3 = inlined_call_operand.vmem [shape: bf16[64,64], index: 3, kind: input, shape index: {}]
  %s4 = inlined_call_operand.vmem [shape: f32[1,64], index: 4, kind: input, shape index: {}]
  %s5 = inlined_call_operand.vmem [shape: f32[1,64], index: 5, kind: input, shape index: {}]
  %s6 = inlined_call_operand.<no memory space> [shape: f32[1,1], index: 6, kind: input, shape index: {}]
  %s7 = inlined_call_operand.vmem [shape: f32[200,1], index: 7, kind: output, shape index: {}]
  %s8 = sld [smem:[#allocation0]]
  $region113: #{tpu_custom_call.1} parent=0
    _
  %s10 = ssub.s32 1, %s8
  %s11 = scalar_select 0, %s10, %s8
  %v12 = vstv %s6
  %13 = vst [vmem:[#allocation2] sm:$0x1] %v12
  $region1: #{tpu_custom_call.1} parent=0
    #allocation3 [shape = 'u8[57344]{0}', space=vmem, size = 0xe000, scoped, tag = 'input window, operand 0']
    #allocation4 [shape = 's32[2]{0}', space=sflag, size = 0x8, scoped, tag = 'scoped memory for tpu_custom_call.1']
    #allocation5 [shape = 'u8[57344]{0}', space=vmem, size = 0xe000, scoped, tag = 'output window, operand 0']
    %14 = vsyncpa [#allocation4], 0
    %s15 = scalar_lea.sflag [#allocation4], 1
    %16 = vsyncpa %s15, 0
    loop: start=0, step=1, limit=6
    $region2: #{tpu_custom_call.1} parent=1 // loop_pre_header
      _
    $region3: #{tpu_custom_call.1} parent=1 // loop_header
      %s18 = sphi 0, %s22
      %p19 = scmp.ge.s32.totalorder %s18, 6
      %s28 = sphi 0, %s30
      %s31 = sphi 0, %s28
      %s32 = sphi 0, %s31
      %s48 = sphi 0, %s32
      %s52 = sphi 0, %s52
      %s54 = sphi 0, %s52
      %s55 = sphi 0, %s54
      %s69 = sphi 0, %s55
      %s73 = sphi 0, %s73
      %s75 = sphi 0, %s73
      %s76 = sphi 0, %s75
      %s90 = sphi 0, %s76
      %s94 = sphi 0, %s94
      %s96 = sphi 0, %s94
      %s97 = sphi 0, %s96
      %s111 = sphi 0, %s97
      %s115 = sphi 0, %s115
      %s117 = sphi 0, %s115
      %s118 = sphi 0, %s117
      %s132 = sphi 0, %s118
      %s136 = sphi 0, %s136
      %s138 = sphi 0, %s136
      %s139 = sphi 0, %s138
      %s153 = sphi 0, %s139
      %s157 = sphi 0, %s157
      %s159 = sphi 0, %s157
      %s160 = sphi 0, %s159
      %s174 = sphi 0, %s160
      %s180 = sphi 0, %s182
      %s183 = sphi 0, %s180
      %s184 = sphi 0, %s183
      %s200 = sphi 0, %s184
    $region4: #{tpu_custom_call.1} parent=1 // loop_header_branch
      %21 = sbr.rel (%p19) target = $region8
    $region5: #{tpu_custom_call.1} parent=1 // loop_body
      %s23 = ssub.s32 %s18, 1
      %s24 = ssub.s32 %s18, 2
      %s25 = sadd.s32 %s18, 1
      %s26 = ssub.s32 %s18, %s25
      %p27 = scmp.eq.s32.totalorder %s26, 0
      %s29 = sadd.s32 %s28, 1
      %s30 = scalar_select %p27, %s28, %s29
      %p33 = pneg %p27
      %p34 = scmp.eq.s32.totalorder %s18, 3
      %p35 = por %p33, %p34
      %p36 = scmp.ne.s32.totalorder %s28, %s31
      %p37 = scmp.eq.s32.totalorder %s18, 0
      %p38 = por %p36, %p37
      %p39 = scmp.ne.s32.totalorder %s28, %s31
      %p40 = scmp.eq.s32.totalorder %s23, 3
      %p41 = por %p39, %p40
      %p42 = scmp.ne.s32.totalorder %s31, %s32
      %p43 = scmp.eq.s32.totalorder %s23, 0
      %p44 = por %p42, %p43
      %p45 = scmp.ne.s32.totalorder %s31, %s32
      %p46 = scmp.eq.s32.totalorder %s24, 3
      %p47 = por %p45, %p46
      %p49 = scmp.ne.s32.totalorder %s32, %s48
      %p50 = scmp.eq.s32.totalorder %s24, 0
      %p51 = por %p49, %p50
      %s53 = sadd.s32 %s52, 1
      %p56 = scmp.eq.s32.totalorder %s18, 3
      %p57 = scmp.ne.s32.totalorder %s52, %s54
      %p58 = scmp.eq.s32.totalorder %s18, 0
      %p59 = por %p57, %p58
      %p60 = scmp.ne.s32.totalorder %s52, %s54
      %p61 = scmp.eq.s32.totalorder %s23, 3
      %p62 = por %p60, %p61
      %p63 = scmp.ne.s32.totalorder %s54, %s55
      %p64 = scmp.eq.s32.totalorder %s23, 0
      %p65 = por %p63, %p64
      %p66 = scmp.ne.s32.totalorder %s54, %s55
      %p67 = scmp.eq.s32.totalorder %s24, 3
      %p68 = por %p66, %p67
      %p70 = scmp.ne.s32.totalorder %s55, %s69
      %p71 = scmp.eq.s32.totalorder %s24, 0
      %p72 = por %p70, %p71
      %s74 = sadd.s32 %s73, 1
      %p77 = scmp.eq.s32.totalorder %s18, 3
      %p78 = scmp.ne.s32.totalorder %s73, %s75
      %p79 = scmp.eq.s32.totalorder %s18, 0
      %p80 = por %p78, %p79
      %p81 = scmp.ne.s32.totalorder %s73, %s75
      %p82 = scmp.eq.s32.totalorder %s23, 3
      %p83 = por %p81, %p82
      %p84 = scmp.ne.s32.totalorder %s75, %s76
      %p85 = scmp.eq.s32.totalorder %s23, 0
      %p86 = por %p84, %p85
      %p87 = scmp.ne.s32.totalorder %s75, %s76
      %p88 = scmp.eq.s32.totalorder %s24, 3
      %p89 = por %p87, %p88
      %p91 = scmp.ne.s32.totalorder %s76, %s90
      %p92 = scmp.eq.s32.totalorder %s24, 0
      %p93 = por %p91, %p92
      %s95 = sadd.s32 %s94, 1
      %p98 = scmp.eq.s32.totalorder %s18, 3
      %p99 = scmp.ne.s32.totalorder %s94, %s96
      %p100 = scmp.eq.s32.totalorder %s18, 0
      %p101 = por %p99, %p100
      %p102 = scmp.ne.s32.totalorder %s94, %s96
      %p103 = scmp.eq.s32.totalorder %s23, 3
      %p104 = por %p102, %p103
      %p105 = scmp.ne.s32.totalorder %s96, %s97
      %p106 = scmp.eq.s32.totalorder %s23, 0
      %p107 = por %p105, %p106
      %p108 = scmp.ne.s32.totalorder %s96, %s97
      %p109 = scmp.eq.s32.totalorder %s24, 3
      %p110 = por %p108, %p109
      %p112 = scmp.ne.s32.totalorder %s97, %s111
      %p113 = scmp.eq.s32.totalorder %s24, 0
      %p114 = por %p112, %p113
      %s116 = sadd.s32 %s115, 1
      %p119 = scmp.eq.s32.totalorder %s18, 3
      %p120 = scmp.ne.s32.totalorder %s115, %s117
      %p121 = scmp.eq.s32.totalorder %s18, 0
      %p122 = por %p120, %p121
      %p123 = scmp.ne.s32.totalorder %s115, %s117
      %p124 = scmp.eq.s32.totalorder %s23, 3
      %p125 = por %p123, %p124
      %p126 = scmp.ne.s32.totalorder %s117, %s118
      %p127 = scmp.eq.s32.totalorder %s23, 0
      %p128 = por %p126, %p127
      %p129 = scmp.ne.s32.totalorder %s117, %s118
      %p130 = scmp.eq.s32.totalorder %s24, 3
      %p131 = por %p129, %p130
      %p133 = scmp.ne.s32.totalorder %s118, %s132
      %p134 = scmp.eq.s32.totalorder %s24, 0
      %p135 = por %p133, %p134
      %s137 = sadd.s32 %s136, 1
      %p140 = scmp.eq.s32.totalorder %s18, 3
      %p141 = scmp.ne.s32.totalorder %s136, %s138
      %p142 = scmp.eq.s32.totalorder %s18, 0
      %p143 = por %p141, %p142
      %p144 = scmp.ne.s32.totalorder %s136, %s138
      %p145 = scmp.eq.s32.totalorder %s23, 3
      %p146 = por %p144, %p145
      %p147 = scmp.ne.s32.totalorder %s138, %s139
      %p148 = scmp.eq.s32.totalorder %s23, 0
      %p149 = por %p147, %p148
      %p150 = scmp.ne.s32.totalorder %s138, %s139
      %p151 = scmp.eq.s32.totalorder %s24, 3
      %p152 = por %p150, %p151
      %p154 = scmp.ne.s32.totalorder %s139, %s153
      %p155 = scmp.eq.s32.totalorder %s24, 0
      %p156 = por %p154, %p155
      %s158 = sadd.s32 %s157, 1
      %p161 = scmp.eq.s32.totalorder %s18, 3
      %p162 = scmp.ne.s32.totalorder %s157, %s159
      %p163 = scmp.eq.s32.totalorder %s18, 0
      %p164 = por %p162, %p163
      %p165 = scmp.ne.s32.totalorder %s157, %s159
      %p166 = scmp.eq.s32.totalorder %s23, 3
      %p167 = por %p165, %p166
      %p168 = scmp.ne.s32.totalorder %s159, %s160
      %p169 = scmp.eq.s32.totalorder %s23, 0
      %p170 = por %p168, %p169
      %p171 = scmp.ne.s32.totalorder %s159, %s160
      %p172 = scmp.eq.s32.totalorder %s24, 3
      %p173 = por %p171, %p172
      %p175 = scmp.ne.s32.totalorder %s160, %s174
      %p176 = scmp.eq.s32.totalorder %s24, 0
      %p177 = por %p175, %p176
      %s178 = ssub.s32 %s18, %s25
      %p179 = scmp.eq.s32.totalorder %s178, 0
      %s181 = sadd.s32 %s180, 1
      %s182 = scalar_select %p179, %s180, %s181
      %p185 = pneg %p179
      %p186 = scmp.eq.s32.totalorder %s18, 3
      %p187 = por %p185, %p186
      %p188 = scmp.ne.s32.totalorder %s180, %s183
      %p189 = scmp.eq.s32.totalorder %s18, 0
      %p190 = por %p188, %p189
      %p191 = scmp.ne.s32.totalorder %s180, %s183
      %p192 = scmp.eq.s32.totalorder %s23, 3
      %p193 = por %p191, %p192
      %p194 = scmp.ne.s32.totalorder %s183, %s184
      %p195 = scmp.eq.s32.totalorder %s23, 0
      %p196 = por %p194, %p195
      %p197 = scmp.ne.s32.totalorder %s183, %s184
      %p198 = scmp.eq.s32.totalorder %s24, 3
      %p199 = por %p197, %p198
      %p201 = scmp.ne.s32.totalorder %s184, %s200
      %p202 = scmp.eq.s32.totalorder %s24, 0
      %p203 = por %p201, %p202
      %p204 = scmp.le.s32.totalorder 1, %s18
      %p205 = scmp.lt.s32.totalorder %s18, 5
      %p206 = pnand %p204, %p205
      %p207 = pneg %p206
      // Predicated region
      $region9: #{tpu_custom_call.1} parent=5 // pred_check
        _
      $region10: #{tpu_custom_call.1} parent=5 // pred_check_branch
        %209 = sbr.rel (%p206) target = $region12
      $region11: #{tpu_custom_call.1} parent=5 // pred_region
        %s210 = ssub.s32 %s18, 1
        // Predicated region
        $region13: #{tpu_custom_call.1} parent=11 // pred_check
          %p211 = pneg %p65
        $region14: #{tpu_custom_call.1} parent=11 // pred_check_branch
          %213 = sbr.rel (%p211) target = $region16
        $region15: #{tpu_custom_call.1} parent=11 // pred_region
          _
        $region16: #{tpu_custom_call.1} parent=11 // pred_fallthru
          _
        // Predicated region
        $region17: #{tpu_custom_call.1} parent=11 // pred_check
          %p214 = pneg %p86
        $region18: #{tpu_custom_call.1} parent=11 // pred_check_branch
          %216 = sbr.rel (%p214) target = $region20
        $region19: #{tpu_custom_call.1} parent=11 // pred_region
          _
        $region20: #{tpu_custom_call.1} parent=11 // pred_fallthru
          _
        // Predicated region
        $region21: #{tpu_custom_call.1} parent=11 // pred_check
          %p217 = pneg %p107
        $region22: #{tpu_custom_call.1} parent=11 // pred_check_branch
          %219 = sbr.rel (%p217) target = $region24
        $region23: #{tpu_custom_call.1} parent=11 // pred_region
          _
        $region24: #{tpu_custom_call.1} parent=11 // pred_fallthru
          _
        // Predicated region
        $region25: #{tpu_custom_call.1} parent=11 // pred_check
          %p220 = pneg %p128
        $region26: #{tpu_custom_call.1} parent=11 // pred_check_branch
          %222 = sbr.rel (%p220) target = $region28
        $region27: #{tpu_custom_call.1} parent=11 // pred_region
          _
        $region28: #{tpu_custom_call.1} parent=11 // pred_fallthru
          _
        // Predicated region
        $region29: #{tpu_custom_call.1} parent=11 // pred_check
          %p223 = pneg %p149
        $region30: #{tpu_custom_call.1} parent=11 // pred_check_branch
          %225 = sbr.rel (%p223) target = $region32
        $region31: #{tpu_custom_call.1} parent=11 // pred_region
          _
        $region32: #{tpu_custom_call.1} parent=11 // pred_fallthru
          _
        // Predicated region
        $region33: #{tpu_custom_call.1} parent=11 // pred_check
          %p226 = pneg %p170
        $region34: #{tpu_custom_call.1} parent=11 // pred_check_branch
          %228 = sbr.rel (%p226) target = $region36
        $region35: #{tpu_custom_call.1} parent=11 // pred_region
          _
        $region36: #{tpu_custom_call.1} parent=11 // pred_fallthru
          _
      $region12: #{tpu_custom_call.1} parent=5 // pred_fallthru
        _
      %p229 = scmp.lt.s32.totalorder %s18, 4
      // Predicated region
      $region37: #{tpu_custom_call.1} parent=5 // pred_check
        %p230 = pneg %p229
      $region38: #{tpu_custom_call.1} parent=5 // pred_check_branch
        %232 = sbr.rel (%p230) target = $region40
      $region39: #{tpu_custom_call.1} parent=5 // pred_region
        // Predicated region
        $region41: #{tpu_custom_call.1} parent=39 // pred_check
          %p233 = pneg %p38
        $region42: #{tpu_custom_call.1} parent=39 // pred_check_branch
          %235 = sbr.rel (%p233) target = $region44
        $region43: #{tpu_custom_call.1} parent=39 // pred_region
          %s236 = sand.u32 %s28, 1
          %s237 = scalar_lea.sflag [#allocation4], %s236
          %s238 = sand.u32 %s28, 1
          %s239 = smul.addr %s238, 56
          %s240 = scalar_lea.vmem [#allocation3], %s239
          %s241 = smul.u32 7, %s18
          %s242 = ssub.s32 25, %s241
          %p243 = scmp.lt.s32.totalorder %s242, 7
          %s244 = scalar_select %p243, %s242, 7
          %s245 = smul.u32 128, %s244
          %s247 = ssub.s32 896, %s245
          %248 = vsyncadd %s237, %s247
          %p249 = scmp.ne.s32.totalorder 0, %s245
          %s250 = smul.addr %s241, 128
          %s251 = scalar_lea.hbm %s0, %s250
          %s252 = smul.u32 8, %s244
          %s253 = sshll.u32 %s240, 4
          %s254 = int_to_ptr.vmem [resolvable:$true] %s253
          %s255 = sshll.u32 %s252, 4
          %259 = dma.hbm_to_vmem [thread:$0]  (%p249), %s251, %s255, %s254, %s237, 128, 128, 8
        $region44: #{tpu_custom_call.1} parent=39 // pred_fallthru
          _
      $region40: #{tpu_custom_call.1} parent=5 // pred_fallthru
        _
      %p260 = scmp.le.s32.totalorder 1, %s18
      %p261 = scmp.lt.s32.totalorder %s18, 5
      %p262 = pnand %p260, %p261
      %p263 = pneg %p262
      // Predicated region
      $region45: #{tpu_custom_call.1} parent=5 // pred_check
        _
      $region46: #{tpu_custom_call.1} parent=5 // pred_check_branch
        %265 = sbr.rel (%p262) target = $region48
      $region47: #{tpu_custom_call.1} parent=5 // pred_region
        %s266 = ssub.s32 %s18, 1
        %s267 = sand.u32 %s31, 1
        %s268 = scalar_lea.sflag [#allocation4], %s267
        %s269 = sand.u32 %s31, 1
        %s270 = smul.addr %s269, 56
        %s271 = scalar_lea.vmem [#allocation3], %s270
        // Predicated region
        $region49: #{tpu_custom_call.1} parent=47 // pred_check
          %p272 = pneg %p44
        $region50: #{tpu_custom_call.1} parent=47 // pred_check_branch
          %274 = sbr.rel (%p272) target = $region52
        $region51: #{tpu_custom_call.1} parent=47 // pred_region
          %275 = dma.done %s268, 896
        $region52: #{tpu_custom_call.1} parent=47 // pred_fallthru
          _
        %s276 = sand.u32 %s31, 1
        %s277 = scalar_lea.sflag [#allocation4], %s276
        %s278 = sand.u32 %s31, 1
        %s279 = smul.addr %s278, 56
        %s280 = scalar_lea.vmem [#allocation3], %s279
        %p281 = pneg %p44
        %p282 = pneg %p41
        %p283 = pneg %p65
        %p284 = pneg %p62
        %p285 = pneg %p86
        %p286 = pneg %p83
        %p287 = pneg %p107
        %p288 = pneg %p104
        %p289 = pneg %p128
        %p290 = pneg %p125
        %p291 = pneg %p149
        %p292 = pneg %p146
        %p293 = pneg %p170
        %p294 = pneg %p167
        %p295 = pneg %p196
        %p296 = pneg %p193
        %s297 = sand.u32 %s183, 1
        %s298 = sand.u32 %s183, 1
        %s299 = smul.addr %s298, 56
        %s300 = scalar_lea.vmem [#allocation5], %s299
        %s301 = smul.u32 7, %s23
        %s302 = ssub.s32 25, %s301
        %p303 = scmp.lt.s32.totalorder %s302, 7
        %s304 = scalar_select %p303, %s302, 7
        %s305 = smul.u32 128, %s304
        %s306 = smul.u32 7, %s23
        %s307 = ssub.s32 25, %s306
        %p308 = scmp.lt.s32.totalorder %s307, 7
        %s309 = scalar_select %p308, %s307, 7
        %s310 = smul.u32 128, %s309
        %v312 = vld [vmem:[%s271] sm:$0xff]
        %v313 = vld [vmem:[%s271 + $0x8] sm:$0xff]
        %v314 = vld [vmem:[%s271 + $0x10] sm:$0xff]
        %v315 = vld [vmem:[%s271 + $0x18] sm:$0xff]
        %v316 = vld [vmem:[%s271 + $0x20] sm:$0xff]
        %v317 = vld [vmem:[%s271 + $0x28] sm:$0xff]
        %v318 = vld [vmem:[%s271 + $0x30] sm:$0xff]
        %v319 = vpack.c.bf16 %v313, %v312
        %v320 = vpack.c.bf16 %v315, %v314
        %v321 = vpack.c.bf16 %v317, %v316
        %v322 = vpack.c.bf16 %v318, %v318
        %v323 = vld [vmem:[%s1] sm:$0xf]
        %v324 = vld [vmem:[%s1 + $0x4] sm:$0xf]
        %v325 = vld [vmem:[%s1 + $0x8] sm:$0xf]
        %v326 = vld [vmem:[%s1 + $0xc] sm:$0xf]
        %v327 = vld [vmem:[%s1 + $0x10] sm:$0xf]
        %v328 = vld [vmem:[%s1 + $0x14] sm:$0xf]
        %v329 = vld [vmem:[%s1 + $0x18] sm:$0xf]
        %v330 = vld [vmem:[%s1 + $0x1c] sm:$0xf]
        %v331 = vld [vmem:[%s1 + $0x20] sm:$0xf]
        %v332 = vld [vmem:[%s1 + $0x24] sm:$0xf]
        %v333 = vld [vmem:[%s1 + $0x28] sm:$0xf]
        %v334 = vld [vmem:[%s1 + $0x2c] sm:$0xf]
        %v335 = vld [vmem:[%s1 + $0x30] sm:$0xf]
        %v336 = vld [vmem:[%s1 + $0x34] sm:$0xf]
        %v337 = vld [vmem:[%s1 + $0x38] sm:$0xf]
        %v338 = vld [vmem:[%s1 + $0x3c] sm:$0xf]
        %v339 = vld [vmem:[%s2] sm:$0x1]
        %v341 = vlaneseq
        %v342 = vshrl.u32 %v341, 7
        %v343 = vsub.s32 0, %v342
        %v344 = vrot.slane %v339, %v343
        %v362 = vunpack.c.l.b16 %v323
        %v363 = vunpack.c.l.b16 %v324
        %v364 = vunpack.c.l.b16 %v325
        %v365 = vunpack.c.l.b16 %v326
        %v366 = vunpack.c.l.b16 %v327
        %v367 = vunpack.c.l.b16 %v328
        %v368 = vunpack.c.l.b16 %v329
        %v369 = vunpack.c.l.b16 %v330
        %v370 = vunpack.c.l.b16 %v331
        %v371 = vunpack.c.l.b16 %v332
        %v372 = vunpack.c.l.b16 %v333
        %v373 = vunpack.c.l.b16 %v334
        %v374 = vunpack.c.l.b16 %v335
        %v375 = vunpack.c.l.b16 %v336
        %v376 = vunpack.c.l.b16 %v337
        %v377 = vunpack.c.l.b16 %v338
        %v378 = vpack.c.b16 %v363, %v362
        %v379 = vpack.c.b16 %v365, %v364
        %v380 = vpack.c.b16 %v367, %v366
        %v381 = vpack.c.b16 %v369, %v368
        %v382 = vpack.c.b16 %v371, %v370
        %v383 = vpack.c.b16 %v373, %v372
        %v384 = vpack.c.b16 %v375, %v374
        %v385 = vpack.c.b16 %v377, %v376
        %394 = vmatprep.subr.bf16.mxu0 0
        %395 = vmatpush1.bf16.msra.mxu0 %v385
        %396 = vmatprep.subr.bf16.mxu0 0
        %397 = vmatpush1.bf16.msra.mxu0 %v384
        %398 = vmatprep.subr.bf16.mxu0 0
        %399 = vmatpush1.bf16.msra.mxu0 %v383
        %400 = vmatprep.subr.bf16.mxu0 0
        %401 = vmatpush1.bf16.msra.mxu0 %v382
        %402 = vmatprep.subr.bf16.mxu0 0
        %403 = vmatpush1.bf16.msra.mxu0 %v381
        %404 = vmatprep.subr.bf16.mxu0 0
        %405 = vmatpush1.bf16.msra.mxu0 %v380
        %406 = vmatprep.subr.bf16.mxu0 0
        %407 = vmatpush1.bf16.msra.mxu0 %v379
        %408 = vmatprep.subr.bf16.mxu0 0
        %409 = vmatpush1.bf16.msra.mxu0 %v378
        %410 = vmatprep.subr.bf16.mxu0 0
        %411 = vmatpush2.bf16.msra.mxu0 0
        %412 = vmatprep.subr.bf16.mxu0 0
        %413 = vmatpush2.bf16.msra.mxu0 0
        %414 = vmatprep.subr.bf16.mxu0 0
        %415 = vmatpush2.bf16.msra.mxu0 0
        %416 = vmatprep.subr.bf16.mxu0 0
        %417 = vmatpush2.bf16.msra.mxu0 0
        %418 = vmatprep.subr.bf16.mxu0 0
        %419 = vmatpush2.bf16.msra.mxu0 0
        %420 = vmatprep.subr.bf16.mxu0 0
        %421 = vmatpush2.bf16.msra.mxu0 0
        %422 = vmatprep.subr.bf16.mxu0 0
        %423 = vmatpush2.bf16.msra.mxu0 0
        %424 = vmatprep.subr.bf16.mxu0 0
        %425 = vmatpush2.bf16.msra.mxu0 0
        %426 = vmatprep.mubr.bf16.mxu0 0
        %427 = vmatmul.mubr.bf16.gmra.mxu0 %v319
        %v428 = vpop.f32.mrf.mxu0
        %v429 = vadd.f32 %v344, %v428
        %v430 = vpop.f32.mrf.mxu0
        %v431 = vpop.f32.mrf.mxu0
        %v432 = vadd.f32 %v344, %v431
        %v433 = vpop.f32.mrf.mxu0
        %434 = vmatprep.mubr.bf16.mxu0 0
        %435 = vmatmul.mubr.bf16.gmra.mxu0 %v320
        %v436 = vpop.f32.mrf.mxu0
        %v437 = vadd.f32 %v344, %v436
        %v438 = vpop.f32.mrf.mxu0
        %v439 = vpop.f32.mrf.mxu0
        %v440 = vadd.f32 %v344, %v439
        %v441 = vpop.f32.mrf.mxu0
        %442 = vmatprep.mubr.bf16.mxu0 0
        %443 = vmatmul.mubr.bf16.gmra.mxu0 %v321
        %v444 = vpop.f32.mrf.mxu0
        %v445 = vadd.f32 %v344, %v444
        %v446 = vpop.f32.mrf.mxu0
        %v447 = vpop.f32.mrf.mxu0
        %v448 = vadd.f32 %v344, %v447
        %v449 = vpop.f32.mrf.mxu0
        %450 = vmatprep.mubr.bf16.mxu0 0
        %451 = vmatmul.mubr.bf16.gmra.mxu0 %v322
        %v452 = vpop.f32.mrf.mxu0
        %v453 = vadd.f32 %v344, %v452
        %v454 = vpop.f32.mrf.mxu0
        %v455 = vpop.f32.mrf.mxu0
        %v456 = vpop.f32.mrf.mxu0
        %457 = vdwg.mxu0
        %v458 = vmax.f32 %v429, 0.0
        %v459 = vmax.f32 %v432, 0.0
        %v460 = vmax.f32 %v437, 0.0
        %v461 = vmax.f32 %v440, 0.0
        %v462 = vmax.f32 %v445, 0.0
        %v463 = vmax.f32 %v448, 0.0
        %v464 = vmax.f32 %v453, 0.0
        %v465 = vpack.c.bf16 %v459, %v458
        %v466 = vpack.c.bf16 %v461, %v460
        %v467 = vpack.c.bf16 %v463, %v462
        %v468 = vpack.c.bf16 %v464, %v464
        %v469 = vld [vmem:[%s3] sm:$0xf]
        %v470 = vld [vmem:[%s3 + $0x4] sm:$0xf]
        %v471 = vld [vmem:[%s3 + $0x8] sm:$0xf]
        %v472 = vld [vmem:[%s3 + $0xc] sm:$0xf]
        %v473 = vld [vmem:[%s3 + $0x10] sm:$0xf]
        %v474 = vld [vmem:[%s3 + $0x14] sm:$0xf]
        %v475 = vld [vmem:[%s3 + $0x18] sm:$0xf]
        %v476 = vld [vmem:[%s3 + $0x1c] sm:$0xf]
        %v477 = vld [vmem:[%s4] sm:$0x1]
        %v479 = vlaneseq
        %v480 = vshrl.u32 %v479, 7
        %v481 = vsub.s32 0, %v480
        %v482 = vrot.slane %v477, %v481
        %v492 = vunpack.c.l.b16 %v469
        %v493 = vunpack.c.l.b16 %v470
        %v494 = vunpack.c.l.b16 %v471
        %v495 = vunpack.c.l.b16 %v472
        %v496 = vunpack.c.l.b16 %v473
        %v497 = vunpack.c.l.b16 %v474
        %v498 = vunpack.c.l.b16 %v475
        %v499 = vunpack.c.l.b16 %v476
        %v500 = vpack.c.b16 %v493, %v492
        %v501 = vpack.c.b16 %v495, %v494
        %v502 = vpack.c.b16 %v497, %v496
        %v503 = vpack.c.b16 %v499, %v498
        %vm508 = vcmask 523264
        %v510 = vsel %vm508, %v465, 0
        %v513 = vsel %vm508, %v466, 0
        %v516 = vsel %vm508, %v467, 0
        %v519 = vsel %vm508, %v468, 0
        %521 = vmatprep.subr.bf16.mxu0 0
        %522 = vmatpush1.bf16.msra.mxu0 0
        %523 = vmatprep.subr.bf16.mxu0 0
        %524 = vmatpush1.bf16.msra.mxu0 0
        %525 = vmatprep.subr.bf16.mxu0 0
        %526 = vmatpush1.bf16.msra.mxu0 0
        %527 = vmatprep.subr.bf16.mxu0 0
        %528 = vmatpush1.bf16.msra.mxu0 0
        %529 = vmatprep.subr.bf16.mxu0 0
        %530 = vmatpush1.bf16.msra.mxu0 %v503
        %531 = vmatprep.subr.bf16.mxu0 0
        %532 = vmatpush1.bf16.msra.mxu0 %v502
        %533 = vmatprep.subr.bf16.mxu0 0
        %534 = vmatpush1.bf16.msra.mxu0 %v501
        %535 = vmatprep.subr.bf16.mxu0 0
        %536 = vmatpush1.bf16.msra.mxu0 %v500
        %537 = vmatprep.subr.bf16.mxu0 0
        %538 = vmatpush2.bf16.msra.mxu0 0
        %539 = vmatprep.subr.bf16.mxu0 0
        %540 = vmatpush2.bf16.msra.mxu0 0
        %541 = vmatprep.subr.bf16.mxu0 0
        %542 = vmatpush2.bf16.msra.mxu0 0
        %543 = vmatprep.subr.bf16.mxu0 0
        %544 = vmatpush2.bf16.msra.mxu0 0
        %545 = vmatprep.subr.bf16.mxu0 0
        %546 = vmatpush2.bf16.msra.mxu0 0
        %547 = vmatprep.subr.bf16.mxu0 0
        %548 = vmatpush2.bf16.msra.mxu0 0
        %549 = vmatprep.subr.bf16.mxu0 0
        %550 = vmatpush2.bf16.msra.mxu0 0
        %551 = vmatprep.subr.bf16.mxu0 0
        %552 = vmatpush2.bf16.msra.mxu0 0
        %553 = vmatprep.mubr.bf16.mxu0 0
        %554 = vmatmul.mubr.bf16.gmra.mxu0 %v510
        %v555 = vpop.f32.mrf.mxu0
        %v556 = vadd.f32 %v482, %v555
        %v557 = vpop.f32.mrf.mxu0
        %v558 = vpop.f32.mrf.mxu0
        %v559 = vadd.f32 %v482, %v558
        %v560 = vpop.f32.mrf.mxu0
        %561 = vmatprep.mubr.bf16.mxu0 0
        %562 = vmatmul.mubr.bf16.gmra.mxu0 %v513
        %v563 = vpop.f32.mrf.mxu0
        %v564 = vadd.f32 %v482, %v563
        %v565 = vpop.f32.mrf.mxu0
        %v566 = vpop.f32.mrf.mxu0
        %v567 = vadd.f32 %v482, %v566
        %v568 = vpop.f32.mrf.mxu0
        %569 = vmatprep.mubr.bf16.mxu0 0
        %570 = vmatmul.mubr.bf16.gmra.mxu0 %v516
        %v571 = vpop.f32.mrf.mxu0
        %v572 = vadd.f32 %v482, %v571
        %v573 = vpop.f32.mrf.mxu0
        %v574 = vpop.f32.mrf.mxu0
        %v575 = vadd.f32 %v482, %v574
        %v576 = vpop.f32.mrf.mxu0
        %577 = vmatprep.mubr.bf16.mxu0 0
        %578 = vmatmul.mubr.bf16.gmra.mxu0 %v519
        %v579 = vpop.f32.mrf.mxu0
        %v580 = vadd.f32 %v482, %v579
        %v581 = vpop.f32.mrf.mxu0
        %v582 = vpop.f32.mrf.mxu0
        %v583 = vpop.f32.mrf.mxu0
        %584 = vdwg.mxu0
        %v585 = vmax.f32 %v556, 0.0
        %v586 = vmax.f32 %v559, 0.0
        %v587 = vmax.f32 %v564, 0.0
        %v588 = vmax.f32 %v567, 0.0
        %v589 = vmax.f32 %v572, 0.0
        %v590 = vmax.f32 %v575, 0.0
        %v591 = vmax.f32 %v580, 0.0
        %v592 = vld [vmem:[%s5] sm:$0x1]
        %v594 = vlaneseq
        %v595 = vshrl.u32 %v594, 7
        %v596 = vsub.s32 0, %v595
        %v597 = vrot.slane %v592, %v596
        %v599 = vmul.f32 %v585, %v597
        %v600 = vmul.f32 %v586, %v597
        %v601 = vmul.f32 %v587, %v597
        %v602 = vmul.f32 %v588, %v597
        %v603 = vmul.f32 %v589, %v597
        %v604 = vmul.f32 %v590, %v597
        %v605 = vmul.f32 %v591, %v597
        %v606 = vsel %vm508, %v599, 0.0
        %607 = vadd.xlane.f32.xlu0 %v606
        %v608 = vpop.xlane.xlu0 %607
        %v609 = vsel %vm508, %v600, 0.0
        %610 = vadd.xlane.f32.xlu0 %v609
        %v611 = vpop.xlane.xlu0 %610
        %v612 = vsel %vm508, %v601, 0.0
        %613 = vadd.xlane.f32.xlu0 %v612
        %v614 = vpop.xlane.xlu0 %613
        %v615 = vsel %vm508, %v602, 0.0
        %616 = vadd.xlane.f32.xlu0 %v615
        %v617 = vpop.xlane.xlu0 %616
        %v618 = vsel %vm508, %v603, 0.0
        %619 = vadd.xlane.f32.xlu0 %v618
        %v620 = vpop.xlane.xlu0 %619
        %v621 = vsel %vm508, %v604, 0.0
        %622 = vadd.xlane.f32.xlu0 %v621
        %v623 = vpop.xlane.xlu0 %622
        %v624 = vsel %vm508, %v605, 0.0
        %625 = vadd.xlane.f32.xlu0 %v624
        %v626 = vpop.xlane.xlu0 %625
        %v627 = vld [vmem:[#allocation2] sm:$0x1]
        %v629 = vlaneseq
        %v630 = vshrl.u32 %v629, 7
        %v631 = vsub.s32 0, %v630
        %v632 = vrot.slane %v627, %v631
        %v634 = vadd.f32 %v608, %v632
        %v635 = vadd.f32 %v611, %v632
        %v636 = vadd.f32 %v614, %v632
        %v637 = vadd.f32 %v617, %v632
        %v638 = vadd.f32 %v620, %v632
        %v639 = vadd.f32 %v623, %v632
        %v640 = vadd.f32 %v626, %v632
        %vm641 = vcmask 7168
        %642 = vst.msk [vmem:[%s300] sm:$0xff] %vm641, %v634
        %643 = vst.msk [vmem:[%s300 + $0x8] sm:$0xff] %vm641, %v635
        %644 = vst.msk [vmem:[%s300 + $0x10] sm:$0xff] %vm641, %v636
        %645 = vst.msk [vmem:[%s300 + $0x18] sm:$0xff] %vm641, %v637
        %646 = vst.msk [vmem:[%s300 + $0x20] sm:$0xff] %vm641, %v638
        %647 = vst.msk [vmem:[%s300 + $0x28] sm:$0xff] %vm641, %v639
        %648 = vst.msk [vmem:[%s300 + $0x30] sm:$0xff] %vm641, %v640
        %s649 = sand.u32 %s183, 1
        %s650 = sand.u32 %s183, 1
        %s651 = smul.addr %s650, 56
        %s652 = scalar_lea.vmem [#allocation5], %s651
        // Predicated region
        $region53: #{tpu_custom_call.1} parent=47 // pred_check
          %p653 = pneg %p193
        $region54: #{tpu_custom_call.1} parent=47 // pred_check_branch
          %655 = sbr.rel (%p653) target = $region56
        $region55: #{tpu_custom_call.1} parent=47 // pred_region
          %s656 = smul.u32 7, %s23
          %s657 = ssub.s32 25, %s656
          %p658 = scmp.lt.s32.totalorder %s657, 7
          %s659 = scalar_select %p658, %s657, 7
          %s660 = smul.u32 128, %s659
          %p661 = scmp.ne.s32.totalorder 0, %s660
          %s662 = smul.addr %s656, 8
          %s663 = scalar_lea.vmem %s7, %s662
          // Predicated region
          $region57: #{tpu_custom_call.1} parent=55 // pred_check
            %p664 = pneg %p661
          $region58: #{tpu_custom_call.1} parent=55 // pred_check_branch
            %666 = sbr.rel (%p664) target = $region60
          $region59: #{tpu_custom_call.1} parent=55 // pred_region
            // Predicated region
            $region61: #{tpu_custom_call.1} parent=59 // pred_check
              _
            $region62: #{tpu_custom_call.1} parent=59 // pred_check_branch
              %668 = sbr.rel (0) target = $region64
            $region63: #{tpu_custom_call.1} parent=59 // pred_region
              // Predicated region
              $region83: #{tpu_custom_call.1} parent=63 // pred_check
                _
              $region84: #{tpu_custom_call.1} parent=63 // pred_check_branch
                %731 = sbr.rel (0) target = $region86
              $region85: #{tpu_custom_call.1} parent=63 // pred_region
                %s732 = sdiv.u32.pop %s659, 7
                %s733 = srem.u32.pop %s659, 7
                // While loop
                $region87: #{tpu_custom_call.1} parent=85 // loop_pre_header
                  _
                $region88: #{tpu_custom_call.1} parent=85 // loop_header
                  %s735 = sphi 0, %s737
                  %p736 = scmp.ge.s32.totalorder %s735, %s732
                  %s740 = sphi 0, %s759
                  %s741 = sphi %s652, %s762
                  %s742 = sphi %s663, %s763
                $region89: #{tpu_custom_call.1} parent=85 // loop_header_branch
                  %739 = sbr.rel (%p736) target = $region93
                $region90: #{tpu_custom_call.1} parent=85 // loop_body
                  %v743 = vld [vmem:[%s741] sm:$0xff]
                  %744 = vst [vmem:[%s742] sm:$0xff] %v743
                  %v745 = vld [vmem:[%s741 + $0x8] sm:$0xff]
                  %746 = vst [vmem:[%s742 + $0x8] sm:$0xff] %v745
                  %v747 = vld [vmem:[%s741 + $0x10] sm:$0xff]
                  %748 = vst [vmem:[%s742 + $0x10] sm:$0xff] %v747
                  %v749 = vld [vmem:[%s741 + $0x18] sm:$0xff]
                  %750 = vst [vmem:[%s742 + $0x18] sm:$0xff] %v749
                  %v751 = vld [vmem:[%s741 + $0x20] sm:$0xff]
                  %752 = vst [vmem:[%s742 + $0x20] sm:$0xff] %v751
                  %v753 = vld [vmem:[%s741 + $0x28] sm:$0xff]
                  %754 = vst [vmem:[%s742 + $0x28] sm:$0xff] %v753
                  %v755 = vld [vmem:[%s741 + $0x30] sm:$0xff]
                  %756 = vst [vmem:[%s742 + $0x30] sm:$0xff] %v755
                  %s757 = sadd.s32 1, %s740
                  %p758 = scmp.ge.s32.totalorder %s757, %s732
                  %s759 = scalar_select %p758, 0, %s757
                  %s760 = smul.u32 %s759, 56
                  %s761 = smul.u32 %s759, 56
                  %s762 = scalar_lea.vmem %s652, %s760 [#allocation5]
                  %s763 = scalar_lea.vmem %s663, %s761
                $region91: #{tpu_custom_call.1} parent=85 // loop_footer
                  %s737 = sadd.s32 %s735, 1
                $region92: #{tpu_custom_call.1} parent=85 // loop_footer_branch
                  %734 = sbr.rel target = $region88
                $region93: #{tpu_custom_call.1} parent=85 // loop_exit
                  _
                %s764 = sdiv.u32.pop %s659, 7
                %s765 = srem.u32.pop %s659, 7
                %s766 = smul.u32 %s764, 7
                %s767 = smul.u32 8, %s766
                %s768 = scalar_lea.vmem %s652, %s767 [#allocation5]
                %s769 = smul.u32 8, %s766
                %s770 = scalar_lea.vmem %s663, %s769
                // While loop
                $region94: #{tpu_custom_call.1} parent=85 // loop_pre_header
                  _
                $region95: #{tpu_custom_call.1} parent=85 // loop_header
                  %s772 = sphi 0, %s774
                  %p773 = scmp.ge.s32.totalorder %s772, %s765
                  %s777 = sphi 0, %s784
                  %s778 = sphi %s768, %s787
                  %s779 = sphi %s770, %s788
                $region96: #{tpu_custom_call.1} parent=85 // loop_header_branch
                  %776 = sbr.rel (%p773) target = $region100
                $region97: #{tpu_custom_call.1} parent=85 // loop_body
                  %v780 = vld [vmem:[%s778] sm:$0xff]
                  %781 = vst [vmem:[%s779] sm:$0xff] %v780
                  %s782 = sadd.s32 1, %s777
                  %p783 = scmp.ge.s32.totalorder %s782, %s765
                  %s784 = scalar_select %p783, 0, %s782
                  %s785 = smul.u32 %s784, 8
                  %s786 = smul.u32 %s784, 8
                  %s787 = scalar_lea.vmem %s768, %s785 [#allocation5]
                  %s788 = scalar_lea.vmem %s770, %s786
                $region98: #{tpu_custom_call.1} parent=85 // loop_footer
                  %s774 = sadd.s32 %s772, 1
                $region99: #{tpu_custom_call.1} parent=85 // loop_footer_branch
                  %771 = sbr.rel target = $region95
                $region100: #{tpu_custom_call.1} parent=85 // loop_exit
                  _
              $region86: #{tpu_custom_call.1} parent=63 // pred_fallthru
                _
              // Predicated region
              $region101: #{tpu_custom_call.1} parent=63 // pred_check
                _
              $region102: #{tpu_custom_call.1} parent=63 // pred_check_branch
                %790 = sbr.rel target = $region104
              $region103: #{tpu_custom_call.1} parent=63 // pred_region
                _
              $region104: #{tpu_custom_call.1} parent=63 // pred_fallthru
                _
            $region64: #{tpu_custom_call.1} parent=59 // pred_fallthru
              _
            // Predicated region
            $region65: #{tpu_custom_call.1} parent=59 // pred_check
              _
            $region66: #{tpu_custom_call.1} parent=59 // pred_check_branch
              %670 = sbr.rel target = $region68
            $region67: #{tpu_custom_call.1} parent=59 // pred_region
              %s672 = ssub.s32 256, 1
              %s673 = sdiv.u32.pop %s659, 7
              %s674 = srem.u32.pop %s659, 7
              // While loop
              $region69: #{tpu_custom_call.1} parent=67 // loop_pre_header
                _
              $region70: #{tpu_custom_call.1} parent=67 // loop_header
                %s676 = sphi 0, %s678
                %p677 = scmp.ge.s32.totalorder %s676, %s673
                %s681 = sphi 0, %s700
                %s682 = sphi %s652, %s703
                %s683 = sphi %s663, %s704
              $region71: #{tpu_custom_call.1} parent=67 // loop_header_branch
                %680 = sbr.rel (%p677) target = $region75
              $region72: #{tpu_custom_call.1} parent=67 // loop_body
                %v684 = vld [vmem:[%s682] sm:%s672]
                %685 = vst [vmem:[%s683] sm:%s672] %v684
                %v686 = vld [vmem:[%s682 + $0x8] sm:%s672]
                %687 = vst [vmem:[%s683 + $0x8] sm:%s672] %v686
                %v688 = vld [vmem:[%s682 + $0x10] sm:%s672]
                %689 = vst [vmem:[%s683 + $0x10] sm:%s672] %v688
                %v690 = vld [vmem:[%s682 + $0x18] sm:%s672]
                %691 = vst [vmem:[%s683 + $0x18] sm:%s672] %v690
                %v692 = vld [vmem:[%s682 + $0x20] sm:%s672]
                %693 = vst [vmem:[%s683 + $0x20] sm:%s672] %v692
                %v694 = vld [vmem:[%s682 + $0x28] sm:%s672]
                %695 = vst [vmem:[%s683 + $0x28] sm:%s672] %v694
                %v696 = vld [vmem:[%s682 + $0x30] sm:%s672]
                %697 = vst [vmem:[%s683 + $0x30] sm:%s672] %v696
                %s698 = sadd.s32 1, %s681
                %p699 = scmp.ge.s32.totalorder %s698, %s673
                %s700 = scalar_select %p699, 0, %s698
                %s701 = smul.u32 %s700, 56
                %s702 = smul.u32 %s700, 56
                %s703 = scalar_lea.vmem %s652, %s701 [#allocation5]
                %s704 = scalar_lea.vmem %s663, %s702
              $region73: #{tpu_custom_call.1} parent=67 // loop_footer
                %s678 = sadd.s32 %s676, 1
              $region74: #{tpu_custom_call.1} parent=67 // loop_footer_branch
                %675 = sbr.rel target = $region70
              $region75: #{tpu_custom_call.1} parent=67 // loop_exit
                _
              %s705 = sdiv.u32.pop %s659, 7
              %s706 = srem.u32.pop %s659, 7
              %s707 = smul.u32 %s705, 7
              %s708 = smul.u32 8, %s707
              %s709 = scalar_lea.vmem %s652, %s708 [#allocation5]
              %s710 = smul.u32 8, %s707
              %s711 = scalar_lea.vmem %s663, %s710
              // While loop
              $region76: #{tpu_custom_call.1} parent=67 // loop_pre_header
                _
              $region77: #{tpu_custom_call.1} parent=67 // loop_header
                %s713 = sphi 0, %s715
                %p714 = scmp.ge.s32.totalorder %s713, %s706
                %s718 = sphi 0, %s725
                %s719 = sphi %s709, %s728
                %s720 = sphi %s711, %s729
              $region78: #{tpu_custom_call.1} parent=67 // loop_header_branch
                %717 = sbr.rel (%p714) target = $region82
              $region79: #{tpu_custom_call.1} parent=67 // loop_body
                %v721 = vld [vmem:[%s719] sm:%s672]
                %722 = vst [vmem:[%s720] sm:%s672] %v721
                %s723 = sadd.s32 1, %s718
                %p724 = scmp.ge.s32.totalorder %s723, %s706
                %s725 = scalar_select %p724, 0, %s723
                %s726 = smul.u32 %s725, 8
                %s727 = smul.u32 %s725, 8
                %s728 = scalar_lea.vmem %s709, %s726 [#allocation5]
                %s729 = scalar_lea.vmem %s711, %s727
              $region80: #{tpu_custom_call.1} parent=67 // loop_footer
                %s715 = sadd.s32 %s713, 1
              $region81: #{tpu_custom_call.1} parent=67 // loop_footer_branch
                %712 = sbr.rel target = $region77
              $region82: #{tpu_custom_call.1} parent=67 // loop_exit
                _
            $region68: #{tpu_custom_call.1} parent=59 // pred_fallthru
              _
          $region60: #{tpu_custom_call.1} parent=55 // pred_fallthru
            _
          %791 = vnop
        $region56: #{tpu_custom_call.1} parent=47 // pred_fallthru
          _
      $region48: #{tpu_custom_call.1} parent=5 // pred_fallthru
        _
      %p792 = scmp.le.s32.totalorder 2, %s18
      // Predicated region
      $region105: #{tpu_custom_call.1} parent=5 // pred_check
        %p793 = pneg %p792
      $region106: #{tpu_custom_call.1} parent=5 // pred_check_branch
        %795 = sbr.rel (%p793) target = $region108
      $region107: #{tpu_custom_call.1} parent=5 // pred_region
        %s796 = ssub.s32 %s18, 2
        // Predicated region
        $region109: #{tpu_custom_call.1} parent=107 // pred_check
          %p797 = pneg %p199
        $region110: #{tpu_custom_call.1} parent=107 // pred_check_branch
          %799 = sbr.rel (%p797) target = $region112
        $region111: #{tpu_custom_call.1} parent=107 // pred_region
          %s800 = sand.u32 %s184, 1
          %s801 = sand.u32 %s184, 1
          %s802 = smul.addr %s801, 56
          %s803 = scalar_lea.vmem [#allocation5], %s802
        $region112: #{tpu_custom_call.1} parent=107 // pred_fallthru
          _
      $region108: #{tpu_custom_call.1} parent=5 // pred_fallthru
        _
    $region6: #{tpu_custom_call.1} parent=1 // loop_footer
      %s22 = sadd.s32 1, %s18
    $region7: #{tpu_custom_call.1} parent=1 // loop_footer_branch
      %17 = sbr.rel target = $region3
    $region8: #{tpu_custom_call.1} parent=1 // loop_exit
      _
    %804 = vsyncpa [#allocation4], 1
    %s805 = scalar_lea.sflag [#allocation4], 1
    %806 = vsyncpa %s805, 1

</llo_original>
